<compile_context>
chip_gen: v7x
topology: tpu7x:2x2x1
jax: 0.10.0
libtpu: 0.0.40
codegen_flags: <defaults>
</compile_context>

<pallas_src>
import math
import numpy as np
import jax
import jax.numpy as jnp
from jax import lax
from jax.experimental import pallas as pl
from jax.experimental.pallas import tpu as pltpu

J_NUM = 15
FACTOR = 10.0
EPS = 1e-3

BONE_LINK = np.array([[1, 0], [2, 1], [1, 3], [1, 4], [3, 5], [4, 6], [5, 7],
                      [6, 8], [2, 9], [2, 10], [9, 11], [10, 12], [11, 13],
                      [12, 14]])
DOUBLE_LINK = np.array([[0, 2], [0, 3], [0, 4], [1, 5], [1, 6], [1, 9],
                        [1, 10], [2, 3], [2, 4], [2, 11], [2, 12], [3, 4],
                        [3, 7], [9, 10], [9, 13], [10, 14]])


def link_mat(j_num, bone_link, double_link):
    a = np.eye(j_num, dtype=np.float32)
    a[bone_link[:, 0], bone_link[:, 1]] = 0.5
    a[bone_link[:, 1], bone_link[:, 0]] = 0.5
    a[double_link[:, 0], double_link[:, 1]] = 0.1
    a[double_link[:, 1], double_link[:, 0]] = 0.1
    return a


def _make_kernel(norm: bool, bblk: int, n: int, use_bf16: bool):
    # Fusing the batch block into one big x @ W matmul is only a clean
    # relayout when N is a sublane multiple; otherwise do per-batch matmuls.
    fuse_support = (n % 8 == 0) and (bblk > 1)

    def gcn_kernel(seg_ref, x_ref, l_ref, w_ref, b_ref, o_ref):
        lmat = l_ref[...]                                   # (J, J) f32
        w = w_ref[...]                                      # (F_in, F_out)
        bias = b_ref[...]                                   # (1, F_out)
        f_in = w.shape[0]

        w_mxu = w.astype(jnp.bfloat16) if use_bf16 else w

        if fuse_support:
            # One fused MXU matmul for the whole batch block: support = x @ W.
            x_all = x_ref[...].reshape(bblk * n, f_in)      # (Bblk*N, F_in)
            if use_bf16:
                x_all = x_all.astype(jnp.bfloat16)
            support_all = jnp.dot(x_all, w_mxu,
                                  preferred_element_type=jnp.float32)
        else:
            support_all = None

        # Static unroll over the (small) batch block.
        for b in range(bblk):
            seg_b = seg_ref[b]                              # (N, J)
            if fuse_support:
                sup_b = support_all[b * n:(b + 1) * n]      # (N, F_out)
            else:
                x_b = x_ref[b]                              # (N, F_in)
                if use_bf16:
                    x_b = x_b.astype(jnp.bfloat16)
                sup_b = jnp.dot(x_b, w_mxu,
                                preferred_element_type=jnp.float32)

            # u = seg^T @ support : contract the vertex dim of both operands
            # (no materialized transpose; MXU "TN" matmul).
            u = lax.dot_general(seg_b, sup_b, (((0,), (0,)), ((), ())),
                                preferred_element_type=jnp.float32)  # (J, F_out)

            if norm:
                # sl = seg @ L is needed for the denominators anyway; reuse it
                # for the output contraction and skip the L @ u matmul.
                sl = jnp.dot(seg_b, lmat,
                             preferred_element_type=jnp.float32)      # (N, J)
                out_b = jnp.dot(sl, u,
                                preferred_element_type=jnp.float32) - sup_b
                # d = rowsum(seg @ L @ seg^T - I) + eps, as an N-vector,
                # without ever forming the (N, N) adjacency.
                s = jnp.sum(seg_b, axis=0, keepdims=True)              # (1, J)
                d = jnp.sum(sl * s, axis=1, keepdims=True) - 1.0 + EPS  # (N,1)
                out_b = out_b * (FACTOR * pl.reciprocal(d, approx=True))
            else:
                v = jnp.dot(lmat, u,
                            preferred_element_type=jnp.float32)        # (J, F_out)
                # adj @ support == seg @ v - support  (exact identity)
                out_b = jnp.dot(seg_b, v,
                                preferred_element_type=jnp.float32) - sup_b

            o_ref[b] = (out_b + bias).astype(o_ref.dtype)
    return gcn_kernel


def dynamic_graph_convolution(x, seg, weight, bias, lmat, *, norm=False,
                              batch_block=None, use_bf16_matmul=False):
    """Batched (x.ndim == 3) forward of DynamicGraphConvolution.

    x:   (B, N, F_in) float32
    seg: (B, N, J)    float32
    weight: (F_in, F_out), bias: (F_out,), lmat: (J, J)
    returns (B, N, F_out) float32
    """
    B, N, F_in = x.shape
    J = seg.shape[-1]
    F_out = weight.shape[1]
    bias2d = bias.reshape(1, F_out)

    # Batch fusion: fewer/larger grid steps amortize per-step overhead, but
    # keep >= 2 steps when B >= 2 so both v7x TensorCores get work.
    if batch_block is None:
        batch_block = max(1, B // 2)
    batch_block = max(1, min(batch_block, B))
    while B % batch_block != 0:
        batch_block -= 1
    num_steps = B // batch_block

    flops = (2 * B * N * F_in * F_out      # x @ W
             + 4 * B * N * J * F_out       # seg^T @ sup  and  seg/sl @ (.)
             + 2 * B * N * F_out)          # -support, +bias
    if norm:
        flops += 2 * B * N * J * J + 2 * B * N * J + B * N * F_out
    else:
        flops += 2 * B * J * J * F_out     # L @ u
    bytes_accessed = 4 * (x.size + seg.size + weight.size + lmat.size
                          + bias.size + B * N * F_out)

    return pl.pallas_call(
        _make_kernel(norm, batch_block, N, use_bf16_matmul),
        out_shape=jax.ShapeDtypeStruct((B, N, F_out), x.dtype),
        grid_spec=pltpu.PrefetchScalarGridSpec(
            num_scalar_prefetch=0,
            grid=(num_steps,),
            in_specs=[
                pl.BlockSpec((batch_block, N, J), lambda b: (b, 0, 0)),     # seg
                pl.BlockSpec((batch_block, N, F_in), lambda b: (b, 0, 0)),  # x
                pl.BlockSpec((J, J), lambda b: (0, 0)),                     # link_mat
                pl.BlockSpec((F_in, F_out), lambda b: (0, 0)),              # weight
                pl.BlockSpec((1, F_out), lambda b: (0, 0)),                 # bias
            ],
            out_specs=pl.BlockSpec((batch_block, N, F_out), lambda b: (b, 0, 0)),
        ),
        compiler_params=pltpu.CompilerParams(
            dimension_semantics=("parallel",)),
        cost_estimate=pl.CostEstimate(
            flops=int(flops),
            transcendentals=int(B * N) if norm else 0,
            bytes_accessed=int(bytes_accessed)),
    )(seg, x, lmat, weight, bias2d)


def reference(x, seg, weight, bias, lmat, *, norm=False):
    adj = jnp.einsum('bnj,jk,bmk->bnm', seg, lmat, seg)
    adj = adj - jnp.eye(adj.shape[1], dtype=adj.dtype)
    if norm:
        adj = adj / (jnp.sum(adj, axis=2, keepdims=True) + EPS) * FACTOR
    support = jnp.einsum('bnf,fo->bno', x, weight)
    out = jnp.einsum('bnm,bmo->bno', adj, support)
    return out + bias


if __name__ == "__main__":
    B, N, F_IN, F_OUT = 2, 16, 32, 32

    key = jax.random.PRNGKey(0)
    kw, kb, kx, ks = jax.random.split(key, 4)

    # Deterministic parameter init mirroring reset_parameters().
    stdv = 6.0 / math.sqrt(F_IN + F_OUT)
    weight = jax.random.uniform(kw, (F_IN, F_OUT), jnp.float32, -stdv, stdv)
    bias = jax.random.uniform(kb, (F_OUT,), jnp.float32, -stdv, stdv)
    lmat = jnp.asarray(link_mat(J_NUM, BONE_LINK, DOUBLE_LINK))

    # Inputs: x (B, N, F_in); seg (B, N, J) soft vertex->joint assignment.
    x = jax.random.normal(kx, (B, N, F_IN), jnp.float32)
    seg = jax.nn.softmax(jax.random.normal(ks, (B, N, J_NUM), jnp.float32), axis=-1)

    # norm=False (module default): strict f32 check.
    out = jax.block_until_ready(
        dynamic_graph_convolution(x, seg, weight, bias, lmat, norm=False))
    ref = reference(x, seg, weight, bias, lmat, norm=False)
    np.testing.assert_allclose(np.asarray(out), np.asarray(ref),
                               rtol=1e-4, atol=1e-4)

    # norm=True branch: looser check (approx reciprocal + exact-but-reordered
    # row-denominator summation).
    out_n = jax.block_until_ready(
        dynamic_graph_convolution(x, seg, weight, bias, lmat, norm=True))
    ref_n = np.asarray(reference(x, seg, weight, bias, lmat, norm=True))
    np.testing.assert_allclose(np.asarray(out_n), ref_n, rtol=1e-2, atol=1e-2)

    # bf16 MXU path (compute lever at realistic sizes): ballpark sanity check.
    out_bf = jax.block_until_ready(dynamic_graph_convolution(
        x, seg, weight, bias, lmat, norm=False, use_bf16_matmul=True))
    assert np.max(np.abs(np.asarray(out_bf) - np.asarray(ref))) < 0.3

    # Exercise the single-step (fused batch block) path as well.
    out_f = jax.block_until_ready(dynamic_graph_convolution(
        x, seg, weight, bias, lmat, norm=False, batch_block=B))
    np.testing.assert_allclose(np.asarray(out_f), np.asarray(ref),
                               rtol=1e-4, atol=1e-4)

    print("KERNEL_OK")
</pallas_src>

<mosaic_0001>
module attributes {stable_mosaic.version = 11 : i64} {
  func.func @gcn_kernel(%arg0: i32, %arg1: memref<1x16x15xf32, #tpu.memory_space<vmem>>, %arg2: memref<1x16x32xf32, #tpu.memory_space<vmem>>, %arg3: memref<15x15xf32, #tpu.memory_space<vmem>>, %arg4: memref<32x32xf32, #tpu.memory_space<vmem>>, %arg5: memref<1x32xf32, #tpu.memory_space<vmem>>, %arg6: memref<1x16x32xf32, #tpu.memory_space<vmem>>) attributes {dimension_semantics = [#tpu.dimension_semantics<parallel>], iteration_bounds = array<i64: 2>, scalar_prefetch = 0 : i64, scratch_operands = 0 : i64, tpu.core_type = #tpu.core_type<tc>, window_params = [{transform_indices = @transform_0, window_bounds = array<i64: 1, 16, 15>}, {transform_indices = @transform_1, window_bounds = array<i64: 1, 16, 32>}, {pipeline_mode = #tpu.pipeline_mode<synchronous>, transform_indices = @transform_2, window_bounds = array<i64: 15, 15>}, {pipeline_mode = #tpu.pipeline_mode<synchronous>, transform_indices = @transform_3, window_bounds = array<i64: 32, 32>}, {pipeline_mode = #tpu.pipeline_mode<synchronous>, transform_indices = @transform_4, window_bounds = array<i64: 1, 32>}, {transform_indices = @transform_5, window_bounds = array<i64: 1, 16, 32>}]} {
    %c0 = arith.constant 0 : index
    %c0_0 = arith.constant 0 : index
    %0 = vector.load %arg3[%c0, %c0_0] : memref<15x15xf32, #tpu.memory_space<vmem>>, vector<15x15xf32>
    %c0_1 = arith.constant 0 : index
    %c0_2 = arith.constant 0 : index
    %1 = vector.load %arg4[%c0_1, %c0_2] : memref<32x32xf32, #tpu.memory_space<vmem>>, vector<32x32xf32>
    %c0_3 = arith.constant 0 : index
    %c0_4 = arith.constant 0 : index
    %2 = vector.load %arg5[%c0_3, %c0_4] : memref<1x32xf32, #tpu.memory_space<vmem>>, vector<1x32xf32>
    %c0_5 = arith.constant 0 : index
    %c0_6 = arith.constant 0 : index
    %c0_7 = arith.constant 0 : index
    %3 = vector.load %arg1[%c0_5, %c0_6, %c0_7] : memref<1x16x15xf32, #tpu.memory_space<vmem>>, vector<1x16x15xf32>
    %4 = vector.shape_cast %3 : vector<1x16x15xf32> to vector<16x15xf32>
    %c0_8 = arith.constant 0 : index
    %c0_9 = arith.constant 0 : index
    %c0_10 = arith.constant 0 : index
    %5 = vector.load %arg2[%c0_8, %c0_9, %c0_10] : memref<1x16x32xf32, #tpu.memory_space<vmem>>, vector<1x16x32xf32>
    %6 = vector.shape_cast %5 : vector<1x16x32xf32> to vector<16x32xf32>
    %cst = arith.constant dense<0.000000e+00> : vector<16x32xf32>
    %7 = tpu.matmul %6, %1, %cst {dimension_numbers = #tpu.dot_dimension_numbers<[1], [0], [0], [1], [0, 0, 1, 1], [], []>} : vector<16x32xf32>, vector<32x32xf32>, vector<16x32xf32> -> vector<16x32xf32>
    %cst_11 = arith.constant dense<0.000000e+00> : vector<15x32xf32>
    %8 = tpu.matmul %4, %7, %cst_11 {dimension_numbers = #tpu.dot_dimension_numbers<[0], [0], [1], [1], [0, 1, 1, 1], [], []>} : vector<16x15xf32>, vector<16x32xf32>, vector<15x32xf32> -> vector<15x32xf32>
    %cst_12 = arith.constant dense<0.000000e+00> : vector<15x32xf32>
    %9 = tpu.matmul %0, %8, %cst_12 {dimension_numbers = #tpu.dot_dimension_numbers<[1], [0], [0], [1], [0, 0, 1, 1], [], []>} : vector<15x15xf32>, vector<15x32xf32>, vector<15x32xf32> -> vector<15x32xf32>
    %cst_13 = arith.constant dense<0.000000e+00> : vector<16x32xf32>
    %10 = tpu.matmul %4, %9, %cst_13 {dimension_numbers = #tpu.dot_dimension_numbers<[1], [0], [0], [1], [0, 0, 1, 1], [], []>} : vector<16x15xf32>, vector<15x32xf32>, vector<16x32xf32> -> vector<16x32xf32>
    %11 = arith.subf %10, %7 : vector<16x32xf32>
    %12 = vector.broadcast %2 : vector<1x32xf32> to vector<16x32xf32>
    %13 = arith.addf %11, %12 : vector<16x32xf32>
    %c0_14 = arith.constant 0 : index
    %c0_15 = arith.constant 0 : index
    %c0_16 = arith.constant 0 : index
    %14 = vector.load %arg6[%c0_14, %c0_15, %c0_16] : memref<1x16x32xf32, #tpu.memory_space<vmem>>, vector<1x16x32xf32>
    %15 = vector.shape_cast %14 : vector<1x16x32xf32> to vector<16x32xf32>
    %16 = vector.shape_cast %13 : vector<16x32xf32> to vector<1x16x32xf32>
    tpu.vector_store %arg6[%c0_14, %c0_15, %c0_16], %16 {strides = array<i32>} : memref<1x16x32xf32, #tpu.memory_space<vmem>>, vector<1x16x32xf32>,
    return
  }
  func.func @transform_0(%arg0: i32) -> (i32, i32, i32) {
    %c0_i32 = arith.constant 0 : i32
    %c0_i32_0 = arith.constant 0 : i32
    %c0_i32_1 = arith.constant 0 : i32
    return %arg0, %c0_i32, %c0_i32_0 : i32, i32, i32
  }
  func.func @transform_1(%arg0: i32) -> (i32, i32, i32) {
    %c0_i32 = arith.constant 0 : i32
    %c0_i32_0 = arith.constant 0 : i32
    %c0_i32_1 = arith.constant 0 : i32
    return %arg0, %c0_i32, %c0_i32_0 : i32, i32, i32
  }
  func.func @transform_2(%arg0: i32) -> (i32, i32) {
    %c0_i32 = arith.constant 0 : i32
    %c0_i32_0 = arith.constant 0 : i32
    %c0_i32_1 = arith.constant 0 : i32
    return %c0_i32, %c0_i32_0 : i32, i32
  }
  func.func @transform_3(%arg0: i32) -> (i32, i32) {
    %c0_i32 = arith.constant 0 : i32
    %c0_i32_0 = arith.constant 0 : i32
    %c0_i32_1 = arith.constant 0 : i32
    return %c0_i32, %c0_i32_0 : i32, i32
  }
  func.func @transform_4(%arg0: i32) -> (i32, i32) {
    %c0_i32 = arith.constant 0 : i32
    %c0_i32_0 = arith.constant 0 : i32
    %c0_i32_1 = arith.constant 0 : i32
    return %c0_i32, %c0_i32_0 : i32, i32
  }
  func.func @transform_5(%arg0: i32) -> (i32, i32, i32) {
    %c0_i32 = arith.constant 0 : i32
    %c0_i32_0 = arith.constant 0 : i32
    %c0_i32_1 = arith.constant 0 : i32
    return %arg0, %c0_i32, %c0_i32_0 : i32, i32, i32
  }
}

</mosaic_0001>

<llo_original>
// kernel: tpu_custom_call.1
$region0: #{tpu_custom_call.1}
  #allocation0 [shape = 'u32[]', space=smem, size = 0x4, offset = 0x4, fixed_abs, tag = 'smem constant byte address 0x4 - core index']
  #allocation1 [shape = 'u32[144,128]{1,0:T(1,128)}', space=vmem, size = 0x12000, scoped, tag = 'internal scratch']
  %s0 = inlined_call_operand.vmem [shape: f32[2,16,15], index: 0, kind: input, shape index: {}]
  %s1 = inlined_call_operand.vmem [shape: f32[2,16,32], index: 1, kind: input, shape index: {}]
  %s2 = inlined_call_operand.hbm [shape: f32[15,15], index: 2, kind: input, shape index: {}]
  %s3 = inlined_call_operand.vmem [shape: f32[32,32], index: 3, kind: input, shape index: {}]
  %s4 = inlined_call_operand.vmem [shape: f32[1,32], index: 4, kind: input, shape index: {}]
  %s5 = inlined_call_operand.hbm [shape: f32[2,16,32], index: 5, kind: output, shape index: {}]
  %s6 = sld [smem:[#allocation0]]
  $region57: #{tpu_custom_call.1} parent=0
    _
  %s8 = ssub.s32 1, %s6
  %s9 = scalar_select 0, %s8, %s6
  $region1: #{tpu_custom_call.1} parent=0
    #allocation2 [shape = 'u8[8192]{0}', space=vmem, size = 0x2000, scoped, tag = 'input window, operand 2, single buffered']
    #allocation3 [shape = 's32[2]{0}', space=sflag, size = 0x8, scoped, tag = 'scoped memory for tpu_custom_call.1']
    #allocation4 [shape = 's32[2]{0}', space=sflag, size = 0x8, scoped, tag = 'scoped memory for tpu_custom_call.1']
    #allocation5 [shape = 'u8[16384]{0}', space=vmem, size = 0x4000, scoped, tag = 'output window, operand 0']
    %10 = vsyncpa [#allocation3], 0
    %11 = vsyncpa [#allocation4], 0
    %s12 = scalar_lea.sflag [#allocation4], 1
    %13 = vsyncpa %s12, 0
    loop: start=0, step=1, limit=4
    $region2: #{tpu_custom_call.1} parent=1 // loop_pre_header
      _
    $region3: #{tpu_custom_call.1} parent=1 // loop_header
      %s15 = sphi 0, %s19
      %p16 = scmp.ge.s32.totalorder %s15, 4
      %s25 = sphi 0, %s27
      %s28 = sphi 0, %s25
      %s29 = sphi 0, %s28
      %s45 = sphi 0, %s29
      %s51 = sphi 0, %s53
      %s54 = sphi 0, %s51
      %s55 = sphi 0, %s54
      %s71 = sphi 0, %s55
      %s75 = sphi 0, %s75
      %s77 = sphi 0, %s75
      %s78 = sphi 0, %s77
      %s92 = sphi 0, %s78
      %s96 = sphi 0, %s96
      %s98 = sphi 0, %s96
      %s99 = sphi 0, %s98
      %s113 = sphi 0, %s99
      %s117 = sphi 0, %s117
      %s119 = sphi 0, %s117
      %s120 = sphi 0, %s119
      %s134 = sphi 0, %s120
      %s140 = sphi 0, %s142
      %s143 = sphi 0, %s140
      %s144 = sphi 0, %s143
      %s160 = sphi 0, %s144
    $region4: #{tpu_custom_call.1} parent=1 // loop_header_branch
      %18 = sbr.rel (%p16) target = $region8
    $region5: #{tpu_custom_call.1} parent=1 // loop_body
      %s20 = ssub.s32 %s15, 1
      %s21 = ssub.s32 %s15, 2
      %s22 = sadd.s32 %s15, 1
      %s23 = ssub.s32 %s15, %s22
      %p24 = scmp.eq.s32.totalorder %s23, 0
      %s26 = sadd.s32 %s25, 1
      %s27 = scalar_select %p24, %s25, %s26
      %p30 = pneg %p24
      %p31 = scmp.eq.s32.totalorder %s15, 1
      %p32 = por %p30, %p31
      %p33 = scmp.ne.s32.totalorder %s25, %s28
      %p34 = scmp.eq.s32.totalorder %s15, 0
      %p35 = por %p33, %p34
      %p36 = scmp.ne.s32.totalorder %s25, %s28
      %p37 = scmp.eq.s32.totalorder %s20, 1
      %p38 = por %p36, %p37
      %p39 = scmp.ne.s32.totalorder %s28, %s29
      %p40 = scmp.eq.s32.totalorder %s20, 0
      %p41 = por %p39, %p40
      %p42 = scmp.ne.s32.totalorder %s28, %s29
      %p43 = scmp.eq.s32.totalorder %s21, 1
      %p44 = por %p42, %p43
      %p46 = scmp.ne.s32.totalorder %s29, %s45
      %p47 = scmp.eq.s32.totalorder %s21, 0
      %p48 = por %p46, %p47
      %s49 = ssub.s32 %s15, %s22
      %p50 = scmp.eq.s32.totalorder %s49, 0
      %s52 = sadd.s32 %s51, 1
      %s53 = scalar_select %p50, %s51, %s52
      %p56 = pneg %p50
      %p57 = scmp.eq.s32.totalorder %s15, 1
      %p58 = por %p56, %p57
      %p59 = scmp.ne.s32.totalorder %s51, %s54
      %p60 = scmp.eq.s32.totalorder %s15, 0
      %p61 = por %p59, %p60
      %p62 = scmp.ne.s32.totalorder %s51, %s54
      %p63 = scmp.eq.s32.totalorder %s20, 1
      %p64 = por %p62, %p63
      %p65 = scmp.ne.s32.totalorder %s54, %s55
      %p66 = scmp.eq.s32.totalorder %s20, 0
      %p67 = por %p65, %p66
      %p68 = scmp.ne.s32.totalorder %s54, %s55
      %p69 = scmp.eq.s32.totalorder %s21, 1
      %p70 = por %p68, %p69
      %p72 = scmp.ne.s32.totalorder %s55, %s71
      %p73 = scmp.eq.s32.totalorder %s21, 0
      %p74 = por %p72, %p73
      %s76 = sadd.s32 %s75, 1
      %p79 = scmp.eq.s32.totalorder %s15, 1
      %p80 = scmp.ne.s32.totalorder %s75, %s77
      %p81 = scmp.eq.s32.totalorder %s15, 0
      %p82 = por %p80, %p81
      %p83 = scmp.ne.s32.totalorder %s75, %s77
      %p84 = scmp.eq.s32.totalorder %s20, 1
      %p85 = por %p83, %p84
      %p86 = scmp.ne.s32.totalorder %s77, %s78
      %p87 = scmp.eq.s32.totalorder %s20, 0
      %p88 = por %p86, %p87
      %p89 = scmp.ne.s32.totalorder %s77, %s78
      %p90 = scmp.eq.s32.totalorder %s21, 1
      %p91 = por %p89, %p90
      %p93 = scmp.ne.s32.totalorder %s78, %s92
      %p94 = scmp.eq.s32.totalorder %s21, 0
      %p95 = por %p93, %p94
      %s97 = sadd.s32 %s96, 1
      %p100 = scmp.eq.s32.totalorder %s15, 1
      %p101 = scmp.ne.s32.totalorder %s96, %s98
      %p102 = scmp.eq.s32.totalorder %s15, 0
      %p103 = por %p101, %p102
      %p104 = scmp.ne.s32.totalorder %s96, %s98
      %p105 = scmp.eq.s32.totalorder %s20, 1
      %p106 = por %p104, %p105
      %p107 = scmp.ne.s32.totalorder %s98, %s99
      %p108 = scmp.eq.s32.totalorder %s20, 0
      %p109 = por %p107, %p108
      %p110 = scmp.ne.s32.totalorder %s98, %s99
      %p111 = scmp.eq.s32.totalorder %s21, 1
      %p112 = por %p110, %p111
      %p114 = scmp.ne.s32.totalorder %s99, %s113
      %p115 = scmp.eq.s32.totalorder %s21, 0
      %p116 = por %p114, %p115
      %s118 = sadd.s32 %s117, 1
      %p121 = scmp.eq.s32.totalorder %s15, 1
      %p122 = scmp.ne.s32.totalorder %s117, %s119
      %p123 = scmp.eq.s32.totalorder %s15, 0
      %p124 = por %p122, %p123
      %p125 = scmp.ne.s32.totalorder %s117, %s119
      %p126 = scmp.eq.s32.totalorder %s20, 1
      %p127 = por %p125, %p126
      %p128 = scmp.ne.s32.totalorder %s119, %s120
      %p129 = scmp.eq.s32.totalorder %s20, 0
      %p130 = por %p128, %p129
      %p131 = scmp.ne.s32.totalorder %s119, %s120
      %p132 = scmp.eq.s32.totalorder %s21, 1
      %p133 = por %p131, %p132
      %p135 = scmp.ne.s32.totalorder %s120, %s134
      %p136 = scmp.eq.s32.totalorder %s21, 0
      %p137 = por %p135, %p136
      %s138 = ssub.s32 %s15, %s22
      %p139 = scmp.eq.s32.totalorder %s138, 0
      %s141 = sadd.s32 %s140, 1
      %s142 = scalar_select %p139, %s140, %s141
      %p145 = pneg %p139
      %p146 = scmp.eq.s32.totalorder %s15, 1
      %p147 = por %p145, %p146
      %p148 = scmp.ne.s32.totalorder %s140, %s143
      %p149 = scmp.eq.s32.totalorder %s15, 0
      %p150 = por %p148, %p149
      %p151 = scmp.ne.s32.totalorder %s140, %s143
      %p152 = scmp.eq.s32.totalorder %s20, 1
      %p153 = por %p151, %p152
      %p154 = scmp.ne.s32.totalorder %s143, %s144
      %p155 = scmp.eq.s32.totalorder %s20, 0
      %p156 = por %p154, %p155
      %p157 = scmp.ne.s32.totalorder %s143, %s144
      %p158 = scmp.eq.s32.totalorder %s21, 1
      %p159 = por %p157, %p158
      %p161 = scmp.ne.s32.totalorder %s144, %s160
      %p162 = scmp.eq.s32.totalorder %s21, 0
      %p163 = por %p161, %p162
      %p164 = scmp.le.s32.totalorder 1, %s15
      %p165 = scmp.lt.s32.totalorder %s15, 3
      %p166 = pnand %p164, %p165
      %p167 = pneg %p166
      // Predicated region
      $region9: #{tpu_custom_call.1} parent=5 // pred_check
        _
      $region10: #{tpu_custom_call.1} parent=5 // pred_check_branch
        %169 = sbr.rel (%p166) target = $region12
      $region11: #{tpu_custom_call.1} parent=5 // pred_region
        %s170 = ssub.s32 %s15, 1
        // Predicated region
        $region13: #{tpu_custom_call.1} parent=11 // pred_check
          %p171 = pneg %p88
        $region14: #{tpu_custom_call.1} parent=11 // pred_check_branch
          %173 = sbr.rel (%p171) target = $region16
        $region15: #{tpu_custom_call.1} parent=11 // pred_region
          %s175 = ssub.s32 256, 256
          %176 = vsyncadd [#allocation3], %s175
          %s177 = sshll.u32 [#allocation2], 4
          %s178 = int_to_ptr.vmem [resolvable:$true] %s177
          %183 = dma.hbm_to_vmem [thread:$0]  %s2, 256, %s178, [#allocation3], 128, 128, 8
        $region16: #{tpu_custom_call.1} parent=11 // pred_fallthru
          _
        // Predicated region
        $region17: #{tpu_custom_call.1} parent=11 // pred_check
          %p184 = pneg %p109
        $region18: #{tpu_custom_call.1} parent=11 // pred_check_branch
          %186 = sbr.rel (%p184) target = $region20
        $region19: #{tpu_custom_call.1} parent=11 // pred_region
          _
        $region20: #{tpu_custom_call.1} parent=11 // pred_fallthru
          _
        // Predicated region
        $region21: #{tpu_custom_call.1} parent=11 // pred_check
          %p187 = pneg %p130
        $region22: #{tpu_custom_call.1} parent=11 // pred_check_branch
          %189 = sbr.rel (%p187) target = $region24
        $region23: #{tpu_custom_call.1} parent=11 // pred_region
          _
        $region24: #{tpu_custom_call.1} parent=11 // pred_fallthru
          _
      $region12: #{tpu_custom_call.1} parent=5 // pred_fallthru
        _
      %p190 = scmp.lt.s32.totalorder %s15, 2
      // Predicated region
      $region25: #{tpu_custom_call.1} parent=5 // pred_check
        %p191 = pneg %p190
      $region26: #{tpu_custom_call.1} parent=5 // pred_check_branch
        %193 = sbr.rel (%p191) target = $region28
      $region27: #{tpu_custom_call.1} parent=5 // pred_region
        // Predicated region
        $region29: #{tpu_custom_call.1} parent=27 // pred_check
          %p194 = pneg %p35
        $region30: #{tpu_custom_call.1} parent=27 // pred_check_branch
          %196 = sbr.rel (%p194) target = $region32
        $region31: #{tpu_custom_call.1} parent=27 // pred_region
          %p197 = scmp.lt.s32.totalorder %s15, 1
          %s198 = scalar_select %p197, %s15, 1
          %s199 = smul.addr %s198, 2
          %s200 = smul.addr %s199, 8
          %s201 = scalar_lea.vmem %s0, %s200
        $region32: #{tpu_custom_call.1} parent=27 // pred_fallthru
          _
        // Predicated region
        $region33: #{tpu_custom_call.1} parent=27 // pred_check
          %p202 = pneg %p61
        $region34: #{tpu_custom_call.1} parent=27 // pred_check_branch
          %204 = sbr.rel (%p202) target = $region36
        $region35: #{tpu_custom_call.1} parent=27 // pred_region
          %p205 = scmp.lt.s32.totalorder %s15, 1
          %s206 = scalar_select %p205, %s15, 1
          %s207 = smul.addr %s206, 2
          %s208 = smul.addr %s207, 8
          %s209 = scalar_lea.vmem %s1, %s208
        $region36: #{tpu_custom_call.1} parent=27 // pred_fallthru
          _
      $region28: #{tpu_custom_call.1} parent=5 // pred_fallthru
        _
      %p210 = scmp.le.s32.totalorder 1, %s15
      %p211 = scmp.lt.s32.totalorder %s15, 3
      %p212 = pnand %p210, %p211
      %p213 = pneg %p212
      // Predicated region
      $region37: #{tpu_custom_call.1} parent=5 // pred_check
        _
      $region38: #{tpu_custom_call.1} parent=5 // pred_check_branch
        %215 = sbr.rel (%p212) target = $region40
      $region39: #{tpu_custom_call.1} parent=5 // pred_region
        %s216 = ssub.s32 %s15, 1
        // Predicated region
        $region41: #{tpu_custom_call.1} parent=39 // pred_check
          %p217 = pneg %p88
        $region42: #{tpu_custom_call.1} parent=39 // pred_check_branch
          %219 = sbr.rel (%p217) target = $region44
        $region43: #{tpu_custom_call.1} parent=39 // pred_region
          %220 = dma.done [#allocation3], 256
        $region44: #{tpu_custom_call.1} parent=39 // pred_fallthru
          _
        %p221 = scmp.lt.s32.totalorder %s20, 1
        %s222 = scalar_select %p221, %s20, 1
        %s223 = smul.addr %s222, 2
        %s224 = smul.addr %s223, 8
        %s225 = scalar_lea.vmem %s0, %s224
        %p226 = pneg %p41
        %p227 = pneg %p38
        %p228 = scmp.lt.s32.totalorder %s20, 1
        %s229 = scalar_select %p228, %s20, 1
        %s230 = smul.addr %s229, 2
        %s231 = smul.addr %s230, 8
        %s232 = scalar_lea.vmem %s1, %s231
        %p233 = pneg %p67
        %p234 = pneg %p64
        %p235 = pneg %p88
        %p236 = pneg %p85
        %p237 = pneg %p109
        %p238 = pneg %p106
        %p239 = pneg %p130
        %p240 = pneg %p127
        %p241 = pneg %p156
        %p242 = pneg %p153
        %s243 = sand.u32 %s143, 1
        %s244 = scalar_lea.sflag [#allocation4], %s243
        %s245 = sand.u32 %s143, 1
        %s246 = smul.addr %s245, 16
        %s247 = scalar_lea.vmem [#allocation5], %s246
        %p248 = scmp.lt.s32.totalorder %s20, 1
        %s249 = scalar_select %p248, %s20, 1
        %s250 = smul.addr %s249, 2
        %s251 = smul.addr %s250, 8
        %s252 = scalar_lea.vmem %s0, %s251
        %p253 = scmp.lt.s32.totalorder %s20, 1
        %s254 = scalar_select %p253, %s20, 1
        %s255 = smul.addr %s254, 2
        %s256 = smul.addr %s255, 8
        %s257 = scalar_lea.vmem %s1, %s256
        %v258 = vld [vmem:[#allocation2] sm:$0xff]
        %v259 = vld [vmem:[#allocation2 + $0x8] sm:$0x7f]
        %v260 = vld [vmem:[%s3] sm:$0xff]
        %v261 = vld [vmem:[%s3 + $0x8] sm:$0xff]
        %v262 = vld [vmem:[%s3 + $0x10] sm:$0xff]
        %v263 = vld [vmem:[%s3 + $0x18] sm:$0xff]
        %v264 = vld [vmem:[%s4] sm:$0x1]
        %v265 = vld [vmem:[%s252] sm:$0xff]
        %v266 = vld [vmem:[%s252 + $0x8] sm:$0xff]
        %v267 = vld [vmem:[%s257] sm:$0xff]
        %v268 = vld [vmem:[%s257 + $0x8] sm:$0xff]
        %vm269 = vcmask 261120
        %v271 = vsel %vm269, %v267, 0
        %v274 = vsel %vm269, %v268, 0
        %276 = vmatprep.subr.mxu0 0.0
        %277 = vmatpush1.msra.mxu0 %v260
        %278 = vmatprep.subr.mxu0 0.0
        %279 = vmatpush1.msra.mxu0 %v261
        %280 = vmatprep.subr.mxu0 0.0
        %281 = vmatpush1.msra.mxu0 %v262
        %282 = vmatprep.subr.mxu0 0.0
        %283 = vmatpush1.msra.mxu0 %v263
        %284 = vmatprep.subr.mxu0 0.0
        %285 = vmatpush1.msra.mxu0 0.0
        %286 = vmatprep.subr.mxu0 0.0
        %287 = vmatpush1.msra.mxu0 0.0
        %288 = vmatprep.subr.mxu0 0.0
        %289 = vmatpush1.msra.mxu0 0.0
        %290 = vmatprep.subr.mxu0 0.0
        %291 = vmatpush1.msra.mxu0 0.0
        %292 = vmatprep.subr.mxu0 0.0
        %293 = vmatpush1.msra.mxu0 0.0
        %294 = vmatprep.subr.mxu0 0.0
        %295 = vmatpush1.msra.mxu0 0.0
        %296 = vmatprep.subr.mxu0 0.0
        %297 = vmatpush1.msra.mxu0 0.0
        %298 = vmatprep.subr.mxu0 0.0
        %299 = vmatpush1.msra.mxu0 0.0
        %300 = vmatprep.subr.mxu0 0.0
        %301 = vmatpush1.msra.mxu0 0.0
        %302 = vmatprep.subr.mxu0 0.0
        %303 = vmatpush1.msra.mxu0 0.0
        %304 = vmatprep.subr.mxu0 0.0
        %305 = vmatpush1.msra.mxu0 0.0
        %306 = vmatprep.subr.mxu0 0.0
        %307 = vmatpush1.msra.mxu0 0.0
        %308 = vmatprep.subr.mxu0 0.0
        %309 = vmatpush1.msra.mxu0 0.0
        %310 = vmatprep.subr.mxu0 0.0
        %311 = vmatpush1.msra.mxu0 0.0
        %312 = vmatprep.subr.mxu0 0.0
        %313 = vmatpush1.msra.mxu0 0.0
        %314 = vmatprep.subr.mxu0 0.0
        %315 = vmatpush1.msra.mxu0 0.0
        %316 = vmatprep.subr.mxu0 0.0
        %317 = vmatpush1.msra.mxu0 0.0
        %318 = vmatprep.subr.mxu0 0.0
        %319 = vmatpush1.msra.mxu0 0.0
        %320 = vmatprep.subr.mxu0 0.0
        %321 = vmatpush1.msra.mxu0 0.0
        %322 = vmatprep.subr.mxu0 0.0
        %323 = vmatpush1.msra.mxu0 0.0
        %324 = vmatprep.subr.mxu0 0.0
        %325 = vmatpush1.msra.mxu0 0.0
        %326 = vmatprep.subr.mxu0 0.0
        %327 = vmatpush1.msra.mxu0 0.0
        %328 = vmatprep.subr.mxu0 0.0
        %329 = vmatpush1.msra.mxu0 0.0
        %330 = vmatprep.subr.mxu0 0.0
        %331 = vmatpush1.msra.mxu0 0.0
        %332 = vmatprep.subr.mxu0 0.0
        %333 = vmatpush1.msra.mxu0 0.0
        %334 = vmatprep.subr.mxu0 0.0
        %335 = vmatpush1.msra.mxu0 0.0
        %336 = vmatprep.subr.mxu0 0.0
        %337 = vmatpush1.msra.mxu0 0.0
        %338 = vmatprep.subr.mxu0 0.0
        %339 = vmatpush1.msra.mxu0 0.0
        %340 = vmatprep.mubr.f32.mxu0 0.0
        %341 = vmatmul.mubr.f32.gmra.mrb[0].mxu0 %v271
        %v342 = vpop.f32.mrb[0].mxu0
        %v343 = vadd.f32 0.0, %v342
        %v344 = vpop.f32.mrb[0].mxu0
        %345 = vmatprep.mubr.f32.mxu0 0.0
        %346 = vmatmul.mubr.f32.gmra.mrb[0].mxu0 %v274
        %v347 = vpop.f32.mrb[0].mxu0
        %v348 = vadd.f32 0.0, %v347
        %v349 = vpop.f32.mrb[0].mxu0
        %350 = vdwg.mxu0
        %351 = vxpose.xlu0.b32.start [1/16] %v265, 128
        %352 = vxpose.xlu0.b32.cont [2/16] %v266, 128
        %353 = vxpose.xlu0.b32.cont [3/16] 0.0, 128
        %354 = vxpose.xlu0.b32.cont [4/16] 0.0, 128
        %355 = vxpose.xlu0.b32.cont [5/16] 0.0, 128
        %356 = vxpose.xlu0.b32.cont [6/16] 0.0, 128
        %357 = vxpose.xlu0.b32.cont [7/16] 0.0, 128
        %358 = vxpose.xlu0.b32.cont [8/16] 0.0, 128
        %359 = vxpose.xlu0.b32.cont [9/16] 0.0, 128
        %360 = vxpose.xlu0.b32.cont [10/16] 0.0, 128
        %361 = vxpose.xlu0.b32.cont [11/16] 0.0, 128
        %362 = vxpose.xlu0.b32.cont [12/16] 0.0, 128
        %363 = vxpose.xlu0.b32.cont [13/16] 0.0, 128
        %364 = vxpose.xlu0.b32.cont [14/16] 0.0, 128
        %365 = vxpose.xlu0.b32.cont [15/16] 0.0, 128
        %366 = vxpose.xlu0.b32.end [16/16] 0.0, 128
        %v367 = vpop.trf.xlu0
        %v368 = vpop.trf.xlu0
        %v369 = vpop.trf.xlu0
        %v370 = vpop.trf.xlu0
        %v371 = vpop.trf.xlu0
        %v372 = vpop.trf.xlu0
        %v373 = vpop.trf.xlu0
        %v374 = vpop.trf.xlu0
        %v375 = vpop.trf.xlu0
        %v376 = vpop.trf.xlu0
        %v377 = vpop.trf.xlu0
        %v378 = vpop.trf.xlu0
        %v379 = vpop.trf.xlu0
        %v380 = vpop.trf.xlu0
        %v381 = vpop.trf.xlu0
        %v382 = vpop.trf.xlu0
        %vm383 = vcmask 130048
        %v385 = vsel %vm383, %v367, 0
        %v388 = vsel %vm383, %v368, 0
        %390 = vmatprep.subr.mxu0 0.0
        %391 = vmatpush1.msra.mxu0 %v343
        %392 = vmatprep.subr.mxu0 0.0
        %393 = vmatpush1.msra.mxu0 %v348
        %394 = vmatprep.subr.mxu0 0.0
        %395 = vmatpush1.msra.mxu0 0.0
        %396 = vmatprep.subr.mxu0 0.0
        %397 = vmatpush1.msra.mxu0 0.0
        %398 = vmatprep.subr.mxu0 0.0
        %399 = vmatpush1.msra.mxu0 0.0
        %400 = vmatprep.subr.mxu0 0.0
        %401 = vmatpush1.msra.mxu0 0.0
        %402 = vmatprep.subr.mxu0 0.0
        %403 = vmatpush1.msra.mxu0 0.0
        %404 = vmatprep.subr.mxu0 0.0
        %405 = vmatpush1.msra.mxu0 0.0
        %406 = vmatprep.subr.mxu0 0.0
        %407 = vmatpush1.msra.mxu0 0.0
        %408 = vmatprep.subr.mxu0 0.0
        %409 = vmatpush1.msra.mxu0 0.0
        %410 = vmatprep.subr.mxu0 0.0
        %411 = vmatpush1.msra.mxu0 0.0
        %412 = vmatprep.subr.mxu0 0.0
        %413 = vmatpush1.msra.mxu0 0.0
        %414 = vmatprep.subr.mxu0 0.0
        %415 = vmatpush1.msra.mxu0 0.0
        %416 = vmatprep.subr.mxu0 0.0
        %417 = vmatpush1.msra.mxu0 0.0
        %418 = vmatprep.subr.mxu0 0.0
        %419 = vmatpush1.msra.mxu0 0.0
        %420 = vmatprep.subr.mxu0 0.0
        %421 = vmatpush1.msra.mxu0 0.0
        %422 = vmatprep.subr.mxu0 0.0
        %423 = vmatpush1.msra.mxu0 0.0
        %424 = vmatprep.subr.mxu0 0.0
        %425 = vmatpush1.msra.mxu0 0.0
        %426 = vmatprep.subr.mxu0 0.0
        %427 = vmatpush1.msra.mxu0 0.0
        %428 = vmatprep.subr.mxu0 0.0
        %429 = vmatpush1.msra.mxu0 0.0
        %430 = vmatprep.subr.mxu0 0.0
        %431 = vmatpush1.msra.mxu0 0.0
        %432 = vmatprep.subr.mxu0 0.0
        %433 = vmatpush1.msra.mxu0 0.0
        %434 = vmatprep.subr.mxu0 0.0
        %435 = vmatpush1.msra.mxu0 0.0
        %436 = vmatprep.subr.mxu0 0.0
        %437 = vmatpush1.msra.mxu0 0.0
        %438 = vmatprep.subr.mxu0 0.0
        %439 = vmatpush1.msra.mxu0 0.0
        %440 = vmatprep.subr.mxu0 0.0
        %441 = vmatpush1.msra.mxu0 0.0
        %442 = vmatprep.subr.mxu0 0.0
        %443 = vmatpush1.msra.mxu0 0.0
        %444 = vmatprep.subr.mxu0 0.0
        %445 = vmatpush1.msra.mxu0 0.0
        %446 = vmatprep.subr.mxu0 0.0
        %447 = vmatpush1.msra.mxu0 0.0
        %448 = vmatprep.subr.mxu0 0.0
        %449 = vmatpush1.msra.mxu0 0.0
        %450 = vmatprep.subr.mxu0 0.0
        %451 = vmatpush1.msra.mxu0 0.0
        %452 = vmatprep.subr.mxu0 0.0
        %453 = vmatpush1.msra.mxu0 0.0
        %454 = vmatprep.mubr.f32.mxu0 0.0
        %455 = vmatmul.mubr.f32.gmra.mrb[0].mxu0 %v385
        %v456 = vpop.f32.mrb[0].mxu0
        %v457 = vadd.f32 0.0, %v456
        %v458 = vpop.f32.mrb[0].mxu0
        %459 = vmatprep.mubr.f32.mxu0 0.0
        %460 = vmatmul.mubr.f32.gmra.mrb[0].mxu0 %v388
        %v461 = vpop.f32.mrb[0].mxu0
        %v462 = vadd.f32 0.0, %v461
        %v463 = vpop.f32.mrb[0].mxu0
        %464 = vdwg.mxu0
        %vm465 = vcmask 121856
        %v467 = vsel %vm465, %v258, 0
        %v470 = vsel %vm465, %v259, 0
        %vm472 = vcmask 1046528
        %v474 = vsel %vm472, %v462, 0
        %476 = vmatprep.subr.mxu0 0.0
        %477 = vmatpush1.msra.mxu0 %v457
        %478 = vmatprep.subr.mxu0 0.0
        %479 = vmatpush1.msra.mxu0 %v474
        %480 = vmatprep.subr.mxu0 0.0
        %481 = vmatpush1.msra.mxu0 0.0
        %482 = vmatprep.subr.mxu0 0.0
        %483 = vmatpush1.msra.mxu0 0.0
        %484 = vmatprep.subr.mxu0 0.0
        %485 = vmatpush1.msra.mxu0 0.0
        %486 = vmatprep.subr.mxu0 0.0
        %487 = vmatpush1.msra.mxu0 0.0
        %488 = vmatprep.subr.mxu0 0.0
        %489 = vmatpush1.msra.mxu0 0.0
        %490 = vmatprep.subr.mxu0 0.0
        %491 = vmatpush1.msra.mxu0 0.0
        %492 = vmatprep.subr.mxu0 0.0
        %493 = vmatpush1.msra.mxu0 0.0
        %494 = vmatprep.subr.mxu0 0.0
        %495 = vmatpush1.msra.mxu0 0.0
        %496 = vmatprep.subr.mxu0 0.0
        %497 = vmatpush1.msra.mxu0 0.0
        %498 = vmatprep.subr.mxu0 0.0
        %499 = vmatpush1.msra.mxu0 0.0
        %500 = vmatprep.subr.mxu0 0.0
        %501 = vmatpush1.msra.mxu0 0.0
        %502 = vmatprep.subr.mxu0 0.0
        %503 = vmatpush1.msra.mxu0 0.0
        %504 = vmatprep.subr.mxu0 0.0
        %505 = vmatpush1.msra.mxu0 0.0
        %506 = vmatprep.subr.mxu0 0.0
        %507 = vmatpush1.msra.mxu0 0.0
        %508 = vmatprep.subr.mxu0 0.0
        %509 = vmatpush1.msra.mxu0 0.0
        %510 = vmatprep.subr.mxu0 0.0
        %511 = vmatpush1.msra.mxu0 0.0
        %512 = vmatprep.subr.mxu0 0.0
        %513 = vmatpush1.msra.mxu0 0.0
        %514 = vmatprep.subr.mxu0 0.0
        %515 = vmatpush1.msra.mxu0 0.0
        %516 = vmatprep.subr.mxu0 0.0
        %517 = vmatpush1.msra.mxu0 0.0
        %518 = vmatprep.subr.mxu0 0.0
        %519 = vmatpush1.msra.mxu0 0.0
        %520 = vmatprep.subr.mxu0 0.0
        %521 = vmatpush1.msra.mxu0 0.0
        %522 = vmatprep.subr.mxu0 0.0
        %523 = vmatpush1.msra.mxu0 0.0
        %524 = vmatprep.subr.mxu0 0.0
        %525 = vmatpush1.msra.mxu0 0.0
        %526 = vmatprep.subr.mxu0 0.0
        %527 = vmatpush1.msra.mxu0 0.0
        %528 = vmatprep.subr.mxu0 0.0
        %529 = vmatpush1.msra.mxu0 0.0
        %530 = vmatprep.subr.mxu0 0.0
        %531 = vmatpush1.msra.mxu0 0.0
        %532 = vmatprep.subr.mxu0 0.0
        %533 = vmatpush1.msra.mxu0 0.0
        %534 = vmatprep.subr.mxu0 0.0
        %535 = vmatpush1.msra.mxu0 0.0
        %536 = vmatprep.subr.mxu0 0.0
        %537 = vmatpush1.msra.mxu0 0.0
        %538 = vmatprep.subr.mxu0 0.0
        %539 = vmatpush1.msra.mxu0 0.0
        %540 = vmatprep.mubr.f32.mxu0 0.0
        %541 = vmatmul.mubr.f32.gmra.mrb[0].mxu0 %v467
        %v542 = vpop.f32.mrb[0].mxu0
        %v543 = vadd.f32 0.0, %v542
        %v544 = vpop.f32.mrb[0].mxu0
        %545 = vmatprep.mubr.f32.mxu0 0.0
        %546 = vmatmul.mubr.f32.gmra.mrb[0].mxu0 %v470
        %v547 = vpop.f32.mrb[0].mxu0
        %v548 = vadd.f32 0.0, %v547
        %v549 = vpop.f32.mrb[0].mxu0
        %550 = vdwg.mxu0
        %v552 = vsel %vm465, %v265, 0
        %v555 = vsel %vm465, %v266, 0
        %v558 = vsel %vm472, %v548, 0
        %560 = vmatprep.subr.mxu0 0.0
        %561 = vmatpush1.msra.mxu0 %v543
        %562 = vmatprep.subr.mxu0 0.0
        %563 = vmatpush1.msra.mxu0 %v558
        %564 = vmatprep.subr.mxu0 0.0
        %565 = vmatpush1.msra.mxu0 0.0
        %566 = vmatprep.subr.mxu0 0.0
        %567 = vmatpush1.msra.mxu0 0.0
        %568 = vmatprep.subr.mxu0 0.0
        %569 = vmatpush1.msra.mxu0 0.0
        %570 = vmatprep.subr.mxu0 0.0
        %571 = vmatpush1.msra.mxu0 0.0
        %572 = vmatprep.subr.mxu0 0.0
        %573 = vmatpush1.msra.mxu0 0.0
        %574 = vmatprep.subr.mxu0 0.0
        %575 = vmatpush1.msra.mxu0 0.0
        %576 = vmatprep.subr.mxu0 0.0
        %577 = vmatpush1.msra.mxu0 0.0
        %578 = vmatprep.subr.mxu0 0.0
        %579 = vmatpush1.msra.mxu0 0.0
        %580 = vmatprep.subr.mxu0 0.0
        %581 = vmatpush1.msra.mxu0 0.0
        %582 = vmatprep.subr.mxu0 0.0
        %583 = vmatpush1.msra.mxu0 0.0
        %584 = vmatprep.subr.mxu0 0.0
        %585 = vmatpush1.msra.mxu0 0.0
        %586 = vmatprep.subr.mxu0 0.0
        %587 = vmatpush1.msra.mxu0 0.0
        %588 = vmatprep.subr.mxu0 0.0
        %589 = vmatpush1.msra.mxu0 0.0
        %590 = vmatprep.subr.mxu0 0.0
        %591 = vmatpush1.msra.mxu0 0.0
        %592 = vmatprep.subr.mxu0 0.0
        %593 = vmatpush1.msra.mxu0 0.0
        %594 = vmatprep.subr.mxu0 0.0
        %595 = vmatpush1.msra.mxu0 0.0
        %596 = vmatprep.subr.mxu0 0.0
        %597 = vmatpush1.msra.mxu0 0.0
        %598 = vmatprep.subr.mxu0 0.0
        %599 = vmatpush1.msra.mxu0 0.0
        %600 = vmatprep.subr.mxu0 0.0
        %601 = vmatpush1.msra.mxu0 0.0
        %602 = vmatprep.subr.mxu0 0.0
        %603 = vmatpush1.msra.mxu0 0.0
        %604 = vmatprep.subr.mxu0 0.0
        %605 = vmatpush1.msra.mxu0 0.0
        %606 = vmatprep.subr.mxu0 0.0
        %607 = vmatpush1.msra.mxu0 0.0
        %608 = vmatprep.subr.mxu0 0.0
        %609 = vmatpush1.msra.mxu0 0.0
        %610 = vmatprep.subr.mxu0 0.0
        %611 = vmatpush1.msra.mxu0 0.0
        %612 = vmatprep.subr.mxu0 0.0
        %613 = vmatpush1.msra.mxu0 0.0
        %614 = vmatprep.subr.mxu0 0.0
        %615 = vmatpush1.msra.mxu0 0.0
        %616 = vmatprep.subr.mxu0 0.0
        %617 = vmatpush1.msra.mxu0 0.0
        %618 = vmatprep.subr.mxu0 0.0
        %619 = vmatpush1.msra.mxu0 0.0
        %620 = vmatprep.subr.mxu0 0.0
        %621 = vmatpush1.msra.mxu0 0.0
        %622 = vmatprep.subr.mxu0 0.0
        %623 = vmatpush1.msra.mxu0 0.0
        %624 = vmatprep.mubr.f32.mxu0 0.0
        %625 = vmatmul.mubr.f32.gmra.mrb[0].mxu0 %v552
        %v626 = vpop.f32.mrb[0].mxu0
        %v627 = vadd.f32 0.0, %v626
        %v628 = vpop.f32.mrb[0].mxu0
        %629 = vmatprep.mubr.f32.mxu0 0.0
        %630 = vmatmul.mubr.f32.gmra.mrb[0].mxu0 %v555
        %v631 = vpop.f32.mrb[0].mxu0
        %v632 = vadd.f32 0.0, %v631
        %v633 = vpop.f32.mrb[0].mxu0
        %634 = vdwg.mxu0
        %v635 = vsub.f32 %v627, %v343
        %v636 = vsub.f32 %v632, %v348
        %v638 = vlaneseq
        %v639 = vshrl.u32 %v638, 7
        %v640 = vsub.s32 0, %v639
        %v641 = vrot.slane %v264, %v640
        %v643 = vadd.f32 %v635, %v641
        %v644 = vadd.f32 %v636, %v641
        %645 = vst.msk [vmem:[%s247] sm:$0xff] %vm269, %v643
        %646 = vst.msk [vmem:[%s247 + $0x8] sm:$0xff] %vm269, %v644
        %s647 = sand.u32 %s143, 1
        %s648 = scalar_lea.sflag [#allocation4], %s647
        %s649 = sand.u32 %s143, 1
        %s650 = smul.addr %s649, 16
        %s651 = scalar_lea.vmem [#allocation5], %s650
        // Predicated region
        $region45: #{tpu_custom_call.1} parent=39 // pred_check
          %p652 = pneg %p153
        $region46: #{tpu_custom_call.1} parent=39 // pred_check_branch
          %654 = sbr.rel (%p652) target = $region48
        $region47: #{tpu_custom_call.1} parent=39 // pred_region
          %s656 = ssub.s32 256, 256
          %657 = vsyncadd %s648, %s656
          %s658 = smul.addr %s20, 2
          %s659 = smul.addr %s658, 128
          %s660 = scalar_lea.hbm %s5, %s659
          %s661 = sshll.u32 %s651, 4
          %s662 = int_to_ptr.vmem [resolvable:$true] %s661
          %667 = dma.vmem_to_hbm [thread:$0]  %s662, 256, %s660, %s648, 128, 128, 8
        $region48: #{tpu_custom_call.1} parent=39 // pred_fallthru
          _
      $region40: #{tpu_custom_call.1} parent=5 // pred_fallthru
        _
      %p668 = scmp.le.s32.totalorder 2, %s15
      // Predicated region
      $region49: #{tpu_custom_call.1} parent=5 // pred_check
        %p669 = pneg %p668
      $region50: #{tpu_custom_call.1} parent=5 // pred_check_branch
        %671 = sbr.rel (%p669) target = $region52
      $region51: #{tpu_custom_call.1} parent=5 // pred_region
        %s672 = ssub.s32 %s15, 2
        // Predicated region
        $region53: #{tpu_custom_call.1} parent=51 // pred_check
          %p673 = pneg %p159
        $region54: #{tpu_custom_call.1} parent=51 // pred_check_branch
          %675 = sbr.rel (%p673) target = $region56
        $region55: #{tpu_custom_call.1} parent=51 // pred_region
          %s676 = sand.u32 %s144, 1
          %s677 = scalar_lea.sflag [#allocation4], %s676
          %s678 = sand.u32 %s144, 1
          %s679 = smul.addr %s678, 16
          %s680 = scalar_lea.vmem [#allocation5], %s679
          %681 = dma.done %s677, 256
        $region56: #{tpu_custom_call.1} parent=51 // pred_fallthru
          _
      $region52: #{tpu_custom_call.1} parent=5 // pred_fallthru
        _
    $region6: #{tpu_custom_call.1} parent=1 // loop_footer
      %s19 = sadd.s32 1, %s15
    $region7: #{tpu_custom_call.1} parent=1 // loop_footer_branch
      %14 = sbr.rel target = $region3
    $region8: #{tpu_custom_call.1} parent=1 // loop_exit
      _
    %682 = vsyncpa [#allocation3], 1
    %s683 = scalar_lea.sflag [#allocation3], 1
    %684 = vsyncpa %s683, 1
    %685 = vsyncpa [#allocation4], 1
    %s686 = scalar_lea.sflag [#allocation4], 1
    %687 = vsyncpa %s686, 1

</llo_original>
